<compile_context>
chip_gen: v7x
topology: tpu7x:2x2x1
jax: 0.10.0
libtpu: 0.0.40
codegen_flags: <defaults>
</compile_context>

<pallas_src>
import jax
import jax.numpy as jnp
from jax.experimental import pallas as pl
from jax.experimental.pallas import tpu as pltpu

_LANE = 128                  # vreg lane width
_SUB = 8                     # f32 sublane granularity
_CHUNK_BYTES = 512 * 1024    # in-kernel compute chunk (bounds live temporaries)


def _cdiv(a, b):
    return (a + b - 1) // b


def _round_up(n, m):
    return _cdiv(n, m) * m


def sigma_kernel(x_ref, w_ref, sel_ref, o_ref):
    """Per-block body.

    x_ref  : (TR, W) f32  -- `segs` consecutive batch rows packed per 128-lane row
    w_ref  : (1, W)  f32  -- parameters tiled across the lane groups (grid-resident)
    sel_ref: (W, S)  f32  -- block-diagonal lane->segment selector (grid-resident)
    o_ref  : (TR, S) f32  -- per-(row, segment) sum of log|x - w|
    """
    rows, width = x_ref.shape
    w = w_ref[...]
    sel = sel_ref[...]

    # Row-chunked compute keeps live element-wise temporaries ~_CHUNK_BYTES
    # no matter how large the HBM<->VMEM tile is.
    ch = min(rows, max(_SUB, (_CHUNK_BYTES // (width * 4)) // _SUB * _SUB))
    n_full = rows // ch
    tail = rows - n_full * ch

    def segsum(xs):
        z = jnp.abs(xs - w)                      # broadcast (1, W) over rows (VPU)
        logz = jnp.log(z)                        # EUP
        # Exact roots (or padded lanes) give log(0) = -inf.  Clamp to a huge
        # finite negative so the zero entries of the selector matmul cannot
        # become 0 * -inf = NaN for *other* batch rows sharing these 128 lanes.
        logz = jnp.maximum(logz, -1e30)
        # Segmented lane reduction on the (otherwise idle) MXU:
        # (rows, W) @ (W, S) -> (rows, S).
        return jnp.dot(logz, sel, preferred_element_type=jnp.float32)

    if n_full == 1 and tail == 0:
        o_ref[...] = segsum(x_ref[...])
    else:
        if n_full > 0:
            def body(c, carry):
                r0 = pl.multiple_of(c * ch, _SUB)
                o_ref[pl.ds(r0, ch), :] = segsum(x_ref[pl.ds(r0, ch), :])
                return carry
            jax.lax.fori_loop(0, n_full, body, 0)
        if tail > 0:
            t0 = n_full * ch
            o_ref[pl.ds(t0, tail), :] = segsum(x_ref[pl.ds(t0, tail), :])


def sigma_forward(x, w, *, tile_bytes=8 * 1024 * 1024):
    """x: (B, P), w: (1, P)  ->  (B, 1) float32 == sum_p log|x - w|."""
    B, P = x.shape
    x = x.astype(jnp.float32)
    w = jnp.asarray(w, jnp.float32).reshape(1, P)

    if _LANE % P == 0:
        # Fast path: a 128-lane row holds `segs` consecutive batch rows.
        # (B, P) -> (rows, 128) is a free row-major reshape (no HBM copy).
        segs = _LANE // P
        width = _LANE
        rows = _cdiv(B, segs)
        if B % segs:
            # Rare edge: pad the flat array so the last row is full.  Padded
            # elements only affect discarded output slots.
            flat = x.reshape(-1)
            pad = jnp.full((rows * _LANE - B * P,), 2.0, jnp.float32)
            xr = jnp.concatenate([flat, pad]).reshape(rows, _LANE)
        else:
            xr = x.reshape(rows, _LANE)
        wr = jnp.tile(w, (1, segs))                              # (1, 128), tiny
    else:
        # Fallback: pad the polynomial axis to a lane multiple; one segment
        # per batch row.  Pad values (x=2, w=1) contribute log(1) = 0 and are
        # masked by the selector anyway.
        segs = 1
        width = _round_up(P, _LANE)
        rows = B
        xr = jnp.pad(x, ((0, 0), (0, width - P)), constant_values=2.0) if width != P else x
        wr = jnp.pad(w, ((0, 0), (0, width - P)), constant_values=1.0) if width != P else w

    # Block-diagonal lane -> segment selector (padded lanes select nothing).
    lane = jnp.arange(width, dtype=jnp.int32)[:, None]
    seg = jnp.arange(segs, dtype=jnp.int32)[None, :]
    sel = ((lane // P) == seg).astype(jnp.float32)               # (width, segs)

    # --- batch-row tiling -------------------------------------------------
    # ~8 MiB x tiles amortize per-grid-step overhead; >= 2 tiles for large
    # inputs so both v7x TensorCores get work; per-tile padding < 8 rows.
    tr_max = max(_SUB, (tile_bytes // (width * 4)) // _SUB * _SUB)
    n_tiles = _cdiv(rows, tr_max)
    if n_tiles == 1 and rows >= 4096:
        n_tiles = 2
    if n_tiles == 1:
        tr = rows                                # block == full extent
    else:
        tr = _round_up(_cdiv(rows, n_tiles), _SUB)
    grid = _cdiv(rows, tr)

    out = pl.pallas_call(
        sigma_kernel,
        out_shape=jax.ShapeDtypeStruct((rows, segs), jnp.float32),
        grid_spec=pltpu.PrefetchScalarGridSpec(
            num_scalar_prefetch=0,
            grid=(grid,),
            in_specs=[
                pl.BlockSpec((tr, width), lambda i: (i, 0)),     # x tile
                pl.BlockSpec((1, width), lambda i: (0, 0)),      # w (resident)
                pl.BlockSpec((width, segs), lambda i: (0, 0)),   # selector (resident)
            ],
            out_specs=pl.BlockSpec((tr, segs), lambda i: (i, 0)),
        ),
        compiler_params=pltpu.CompilerParams(
            dimension_semantics=("parallel",),       # batch tiles shard across TCs
            vmem_limit_bytes=32 * 1024 * 1024,       # ~18 MiB live at 8 MiB tiles
        ),
        cost_estimate=pl.CostEstimate(
            flops=2 * rows * width * (1 + segs),
            transcendentals=rows * width,
            bytes_accessed=rows * width * 4 + rows * segs * 4
                           + width * 4 + width * segs * 4,
        ),
    )(xr, wr, sel)

    # (rows, segs) flattens row-major back to original batch order.
    return out.reshape(-1)[:B].reshape(B, 1)


def sigma_reference(x, w):
    return jnp.sum(jnp.log(jnp.abs(x - w)), axis=1, keepdims=True)


if __name__ == "__main__":
    poly_order = 32
    batch = 8

    key = jax.random.PRNGKey(0)
    kx, kw = jax.random.split(key)

    w = jax.random.normal(kw, (1, poly_order), dtype=jnp.float32)
    x = jax.random.normal(kx, (batch, poly_order), dtype=jnp.float32)

    out = jax.block_until_ready(sigma_forward(x, w))

    ref = sigma_reference(x, w)
    assert out.shape == (batch, 1)
    assert jnp.allclose(out, ref, atol=1e-3, rtol=1e-3), (out, ref)

    print("KERNEL_OK")
</pallas_src>

<mosaic_0001>
module attributes {stable_mosaic.version = 11 : i64} {
  func.func @sigma_kernel(%arg0: i32, %arg1: memref<2x128xf32, #tpu.memory_space<vmem>>, %arg2: memref<1x128xf32, #tpu.memory_space<vmem>>, %arg3: memref<128x4xf32, #tpu.memory_space<vmem>>, %arg4: memref<2x4xf32, #tpu.memory_space<vmem>>) attributes {dimension_semantics = [#tpu.dimension_semantics<parallel>], iteration_bounds = array<i64: 1>, scalar_prefetch = 0 : i64, scratch_operands = 0 : i64, tpu.core_type = #tpu.core_type<tc>, window_params = [{transform_indices = @transform_0, window_bounds = array<i64: 2, 128>}, {pipeline_mode = #tpu.pipeline_mode<synchronous>, transform_indices = @transform_1, window_bounds = array<i64: 1, 128>}, {pipeline_mode = #tpu.pipeline_mode<synchronous>, transform_indices = @transform_2, window_bounds = array<i64: 128, 4>}, {transform_indices = @transform_3, window_bounds = array<i64: 2, 4>}]} {
    %c0 = arith.constant 0 : index
    %c0_0 = arith.constant 0 : index
    %0 = vector.load %arg2[%c0, %c0_0] : memref<1x128xf32, #tpu.memory_space<vmem>>, vector<1x128xf32>
    %c0_1 = arith.constant 0 : index
    %c0_2 = arith.constant 0 : index
    %1 = vector.load %arg3[%c0_1, %c0_2] : memref<128x4xf32, #tpu.memory_space<vmem>>, vector<128x4xf32>
    %c0_3 = arith.constant 0 : index
    %c0_4 = arith.constant 0 : index
    %2 = vector.load %arg1[%c0_3, %c0_4] : memref<2x128xf32, #tpu.memory_space<vmem>>, vector<2x128xf32>
    %3 = vector.broadcast %0 : vector<1x128xf32> to vector<2x128xf32>
    %4 = arith.subf %2, %3 : vector<2x128xf32>
    %5 = math.absf %4 : vector<2x128xf32>
    %6 = math.log %5 : vector<2x128xf32>
    %cst = arith.constant -1.000000e+30 : f32
    %7 = vector.broadcast %cst : f32 to vector<2x128xf32>
    %8 = arith.maximumf %6, %7 : vector<2x128xf32>
    %cst_5 = arith.constant dense<0.000000e+00> : vector<2x4xf32>
    %9 = tpu.matmul %8, %1, %cst_5 {dimension_numbers = #tpu.dot_dimension_numbers<[1], [0], [0], [1], [0, 0, 1, 1], [], []>} : vector<2x128xf32>, vector<128x4xf32>, vector<2x4xf32> -> vector<2x4xf32>
    %c0_6 = arith.constant 0 : index
    %c0_7 = arith.constant 0 : index
    %10 = vector.load %arg4[%c0_6, %c0_7] : memref<2x4xf32, #tpu.memory_space<vmem>>, vector<2x4xf32>
    tpu.vector_store %arg4[%c0_6, %c0_7], %9 {strides = array<i32>} : memref<2x4xf32, #tpu.memory_space<vmem>>, vector<2x4xf32>,
    return
  }
  func.func @transform_0(%arg0: i32) -> (i32, i32) {
    %c0_i32 = arith.constant 0 : i32
    %c0_i32_0 = arith.constant 0 : i32
    return %arg0, %c0_i32 : i32, i32
  }
  func.func @transform_1(%arg0: i32) -> (i32, i32) {
    %c0_i32 = arith.constant 0 : i32
    %c0_i32_0 = arith.constant 0 : i32
    %c0_i32_1 = arith.constant 0 : i32
    return %c0_i32, %c0_i32_0 : i32, i32
  }
  func.func @transform_2(%arg0: i32) -> (i32, i32) {
    %c0_i32 = arith.constant 0 : i32
    %c0_i32_0 = arith.constant 0 : i32
    %c0_i32_1 = arith.constant 0 : i32
    return %c0_i32, %c0_i32_0 : i32, i32
  }
  func.func @transform_3(%arg0: i32) -> (i32, i32) {
    %c0_i32 = arith.constant 0 : i32
    %c0_i32_0 = arith.constant 0 : i32
    return %arg0, %c0_i32 : i32, i32
  }
}

</mosaic_0001>

<llo_original>
// kernel: tpu_custom_call.1
$region0: #{tpu_custom_call.1}
  #allocation0 [shape = 'u32[]', space=smem, size = 0x4, offset = 0x4, fixed_abs, tag = 'smem constant byte address 0x4 - core index']
  #allocation1 [shape = 'u32[144,128]{1,0:T(1,128)}', space=vmem, size = 0x12000, scoped, tag = 'internal scratch']
  %s0 = inlined_call_operand.vmem [shape: f32[2,128], index: 0, kind: input, shape index: {}]
  %s1 = inlined_call_operand.vmem [shape: f32[1,128], index: 1, kind: input, shape index: {}]
  %s2 = inlined_call_operand.vmem [shape: f32[128,4], index: 2, kind: input, shape index: {}]
  %s3 = inlined_call_operand.hbm [shape: f32[2,4], index: 3, kind: output, shape index: {}]
  %s4 = sld [smem:[#allocation0]]
  $region22: #{tpu_custom_call.1} parent=0
    _
  %s6 = ssub.s32 1, %s4
  %s7 = scalar_select 0, %s6, %s4
  $region1: #{tpu_custom_call.1} parent=0
    #allocation2 [shape = 'u8[1024]{0}', space=vmem, size = 0x400, scoped, tag = 'output window, operand 0, single buffered']
    #allocation3 [shape = 's32[1]{0}', space=sflag, size = 0x4, scoped, tag = 'scoped memory for tpu_custom_call.1']
    %8 = vsyncpa [#allocation3], 0
    // Predicated region
    $region2: #{tpu_custom_call.1} parent=1 // pred_check
      _
    $region3: #{tpu_custom_call.1} parent=1 // pred_check_branch
      %10 = sbr.rel (0) target = $region5
    $region4: #{tpu_custom_call.1} parent=1 // pred_region
      _
    $region5: #{tpu_custom_call.1} parent=1 // pred_fallthru
      _
    // Predicated region
    $region6: #{tpu_custom_call.1} parent=1 // pred_check
      _
    $region7: #{tpu_custom_call.1} parent=1 // pred_check_branch
      %12 = sbr.rel (0) target = $region9
    $region8: #{tpu_custom_call.1} parent=1 // pred_region
      _
    $region9: #{tpu_custom_call.1} parent=1 // pred_fallthru
      _
    // Predicated region
    $region10: #{tpu_custom_call.1} parent=1 // pred_check
      _
    $region11: #{tpu_custom_call.1} parent=1 // pred_check_branch
      %14 = sbr.rel (0) target = $region13
    $region12: #{tpu_custom_call.1} parent=1 // pred_region
      _
    $region13: #{tpu_custom_call.1} parent=1 // pred_fallthru
      _
    %v15 = vld [vmem:[%s1] sm:$0x1]
    %v16 = vld [vmem:[%s2] sm:$0xff]
    %v17 = vld [vmem:[%s2 + $0x8] sm:$0xff]
    %v18 = vld [vmem:[%s2 + $0x10] sm:$0xff]
    %v19 = vld [vmem:[%s2 + $0x18] sm:$0xff]
    %v20 = vld [vmem:[%s2 + $0x20] sm:$0xff]
    %v21 = vld [vmem:[%s2 + $0x28] sm:$0xff]
    %v22 = vld [vmem:[%s2 + $0x30] sm:$0xff]
    %v23 = vld [vmem:[%s2 + $0x38] sm:$0xff]
    %v24 = vld [vmem:[%s2 + $0x40] sm:$0xff]
    %v25 = vld [vmem:[%s2 + $0x48] sm:$0xff]
    %v26 = vld [vmem:[%s2 + $0x50] sm:$0xff]
    %v27 = vld [vmem:[%s2 + $0x58] sm:$0xff]
    %v28 = vld [vmem:[%s2 + $0x60] sm:$0xff]
    %v29 = vld [vmem:[%s2 + $0x68] sm:$0xff]
    %v30 = vld [vmem:[%s2 + $0x70] sm:$0xff]
    %v31 = vld [vmem:[%s2 + $0x78] sm:$0xff]
    %v32 = vld [vmem:[%s0] sm:$0x3]
    %v34 = vlaneseq
    %v35 = vshrl.u32 %v34, 7
    %v36 = vsub.s32 0, %v35
    %v37 = vrot.slane %v15, %v36
    %v39 = vsub.f32 %v32, %v37
    %v40 = vand.u32 2147483647, %v39
    %v41 = vlog2.pop %v40
    %v42 = vmul.f32 %v41, 0.6931472
    %v43 = vmax.f32 %v42, -1e+30
    %44 = vmatprep.subr.mxu0 0.0
    %45 = vmatpush1.msra.mxu0 %v16
    %46 = vmatprep.subr.mxu0 0.0
    %47 = vmatpush1.msra.mxu0 %v17
    %48 = vmatprep.subr.mxu0 0.0
    %49 = vmatpush1.msra.mxu0 %v18
    %50 = vmatprep.subr.mxu0 0.0
    %51 = vmatpush1.msra.mxu0 %v19
    %52 = vmatprep.subr.mxu0 0.0
    %53 = vmatpush1.msra.mxu0 %v20
    %54 = vmatprep.subr.mxu0 0.0
    %55 = vmatpush1.msra.mxu0 %v21
    %56 = vmatprep.subr.mxu0 0.0
    %57 = vmatpush1.msra.mxu0 %v22
    %58 = vmatprep.subr.mxu0 0.0
    %59 = vmatpush1.msra.mxu0 %v23
    %60 = vmatprep.subr.mxu0 0.0
    %61 = vmatpush1.msra.mxu0 %v24
    %62 = vmatprep.subr.mxu0 0.0
    %63 = vmatpush1.msra.mxu0 %v25
    %64 = vmatprep.subr.mxu0 0.0
    %65 = vmatpush1.msra.mxu0 %v26
    %66 = vmatprep.subr.mxu0 0.0
    %67 = vmatpush1.msra.mxu0 %v27
    %68 = vmatprep.subr.mxu0 0.0
    %69 = vmatpush1.msra.mxu0 %v28
    %70 = vmatprep.subr.mxu0 0.0
    %71 = vmatpush1.msra.mxu0 %v29
    %72 = vmatprep.subr.mxu0 0.0
    %73 = vmatpush1.msra.mxu0 %v30
    %74 = vmatprep.subr.mxu0 0.0
    %75 = vmatpush1.msra.mxu0 %v31
    %76 = vmatprep.subr.mxu0 0.0
    %77 = vmatpush1.msra.mxu0 0.0
    %78 = vmatprep.subr.mxu0 0.0
    %79 = vmatpush1.msra.mxu0 0.0
    %80 = vmatprep.subr.mxu0 0.0
    %81 = vmatpush1.msra.mxu0 0.0
    %82 = vmatprep.subr.mxu0 0.0
    %83 = vmatpush1.msra.mxu0 0.0
    %84 = vmatprep.subr.mxu0 0.0
    %85 = vmatpush1.msra.mxu0 0.0
    %86 = vmatprep.subr.mxu0 0.0
    %87 = vmatpush1.msra.mxu0 0.0
    %88 = vmatprep.subr.mxu0 0.0
    %89 = vmatpush1.msra.mxu0 0.0
    %90 = vmatprep.subr.mxu0 0.0
    %91 = vmatpush1.msra.mxu0 0.0
    %92 = vmatprep.subr.mxu0 0.0
    %93 = vmatpush1.msra.mxu0 0.0
    %94 = vmatprep.subr.mxu0 0.0
    %95 = vmatpush1.msra.mxu0 0.0
    %96 = vmatprep.subr.mxu0 0.0
    %97 = vmatpush1.msra.mxu0 0.0
    %98 = vmatprep.subr.mxu0 0.0
    %99 = vmatpush1.msra.mxu0 0.0
    %100 = vmatprep.subr.mxu0 0.0
    %101 = vmatpush1.msra.mxu0 0.0
    %102 = vmatprep.subr.mxu0 0.0
    %103 = vmatpush1.msra.mxu0 0.0
    %104 = vmatprep.subr.mxu0 0.0
    %105 = vmatpush1.msra.mxu0 0.0
    %106 = vmatprep.subr.mxu0 0.0
    %107 = vmatpush1.msra.mxu0 0.0
    %108 = vmatprep.mubr.f32.mxu0 0.0
    %109 = vmatmul.mubr.f32.gmra.mrb[0].mxu0 %v43
    %v110 = vpop.f32.mrb[0].mxu0
    %v111 = vadd.f32 0.0, %v110
    %v112 = vpop.f32.mrb[0].mxu0
    %113 = vdwg.mxu0
    %vm114 = vcmask 25600
    %115 = vst.msk [vmem:[#allocation2] sm:$0x3] %vm114, %v111
    // Predicated region
    $region14: #{tpu_custom_call.1} parent=1 // pred_check
      _
    $region15: #{tpu_custom_call.1} parent=1 // pred_check_branch
      %117 = sbr.rel (0) target = $region17
    $region16: #{tpu_custom_call.1} parent=1 // pred_region
      %s119 = ssub.s32 32, 32
      %120 = vsyncadd [#allocation3], %s119
      %s122 = sshll.u32 [#allocation2], 4
      %s123 = int_to_ptr.vmem [resolvable:$true] %s122
      %125 = dma.vmem_to_hbm [thread:$0]  %s123, 32, %s3, [#allocation3]
    $region17: #{tpu_custom_call.1} parent=1 // pred_fallthru
      _
    // Predicated region
    $region18: #{tpu_custom_call.1} parent=1 // pred_check
      _
    $region19: #{tpu_custom_call.1} parent=1 // pred_check_branch
      %127 = sbr.rel (0) target = $region21
    $region20: #{tpu_custom_call.1} parent=1 // pred_region
      %128 = dma.done [#allocation3], 32
    $region21: #{tpu_custom_call.1} parent=1 // pred_fallthru
      _
    %129 = vsyncpa [#allocation3], 1

</llo_original>
